<compile_context>
chip_gen: v7x
topology: tpu7x:2x2x1
jax: 0.10.0
libtpu: 0.0.40
codegen_flags: <defaults>
</compile_context>

<pallas_src>
import jax
import jax.numpy as jnp
from jax.experimental import pallas as pl
from jax.experimental.pallas import tpu as pltpu


def _round_up(x, m):
    return ((x + m - 1) // m) * m


def _gin_kernel(at_ref, x_ref, out_ref):
    """out[j] += A_hat^T[j, k] @ x[k] -- bf16 MXU, exact f32 accumulation."""
    k = pl.program_id(1)
    partial = jnp.dot(at_ref[...], x_ref[...],
                      preferred_element_type=jnp.float32)

    @pl.when(k == 0)
    def _():
        out_ref[...] = partial          # init: no separate zero pass needed

    @pl.when(k > 0)
    def _():
        out_ref[...] += partial         # accumulate directly into resident out


def preprocess_adjacency(adj, eps, n_pad):
    """One-time A_hat^T = A^T + (1+eps)*I, zero-padded to (n_pad, n_pad), bf16.

    Hoist/cache this per graph if the same adjacency is reused across forward
    calls: it is a full N^2 transpose/cast pass ahead of the kernel.
    The (1+eps) fold is applied before padding, so padded rows/cols keep a
    zero diagonal.
    """
    N = adj.shape[0]
    a_hat_t = adj.T.astype(jnp.float32) + (1.0 + float(eps)) * jnp.eye(
        N, dtype=jnp.float32)
    a_hat_t = jnp.pad(a_hat_t, ((0, n_pad - N), (0, n_pad - N)))
    return a_hat_t.astype(jnp.bfloat16)


def non_para_gin_conv(adj, x, eps):
    """adj: (N, N) dense 0/1 adjacency (adj[u, v] = 1 for edge u->v); x: (N, F)."""
    N, F = x.shape
    assert adj.shape == (N, N)

    F_pad = _round_up(F, 128)                      # lane-dense output stores

    # ---- Tiling decision -----------------------------------------------------
    # Small/medium graphs: make x fully VMEM-resident (single k step, x fetched
    # from HBM once).  TV is kept large; for N_pad > TV the destination axis has
    # >= 2 tiles so both v7x TensorCores get work.
    TV_c = min(512, _round_up(N, 128))
    N_pad_c = _round_up(N, TV_c)
    x_resident = (N_pad_c * F_pad * 2 <= 8 * 1024 * 1024 and      # bf16 x block
                  TV_c * N_pad_c * 2 <= 8 * 1024 * 1024)          # bf16 A strip
    if x_resident:
        TV, TU, N_pad = TV_c, N_pad_c, N_pad_c
    else:
        TV, TU = 512, 1024
        N_pad = _round_up(N, TU)

    Jn, Kn = N_pad // TV, N_pad // TU

    # ---- Operands (bf16 feeds for the MXU; accumulation stays f32) -----------
    a_hat_t = preprocess_adjacency(adj, eps, N_pad)               # (N_pad, N_pad) bf16
    x_bf = jnp.pad(x.astype(jnp.bfloat16),
                   ((0, N_pad - N), (0, F_pad - F)))              # (N_pad, F_pad) bf16

    # ---- VMEM budget (double-buffered A tiles + x block(s) + f32 out tile) ---
    est = (2 * TV * TU * 2            # A_hat^T bf16 tiles
           + 2 * TU * F_pad * 2       # x bf16 block(s)
           + 2 * TV * F_pad * 4)      # out f32 tile(s)
    vmem_limit = min(max(2 * est, 32 * 1024 * 1024), 48 * 1024 * 1024)

    out = pl.pallas_call(
        _gin_kernel,
        out_shape=jax.ShapeDtypeStruct((N_pad, F_pad), jnp.float32),
        grid_spec=pltpu.PrefetchScalarGridSpec(
            num_scalar_prefetch=0,
            grid=(Jn, Kn),
            in_specs=[
                # A_hat^T tile: rows = destination nodes (j), cols = sources (k).
                pl.BlockSpec((TV, TU), lambda j, k: (j, k)),
                # Source features. When Kn == 1 (resident path) the block index
                # is constant, so Pallas fetches x exactly once.
                pl.BlockSpec((TU, F_pad), lambda j, k: (k, 0)),
            ],
            # Block index constant along k -> out tile is the VMEM accumulator.
            out_specs=pl.BlockSpec((TV, F_pad), lambda j, k: (j, 0)),
        ),
        compiler_params=pltpu.CompilerParams(
            dimension_semantics=("parallel", "arbitrary"),
            vmem_limit_bytes=vmem_limit,
        ),
    )(a_hat_t, x_bf)

    return out[:N, :F]


if __name__ == "__main__":
    key = jax.random.PRNGKey(0)
    k_adj, k_x = jax.random.split(key)

    N, F = 128, 32          # small graph: 128 nodes, 32-dim features
    eps = 0.5               # module hyperparameter (NonParaGINConv(eps))

    # deterministic synthetic directed graph (dense 0/1 adjacency), f32 features
    adj = (jax.random.uniform(k_adj, (N, N)) < 0.1).astype(jnp.float32)
    x = jax.random.normal(k_x, (N, F), dtype=jnp.float32)

    out = non_para_gin_conv(adj, x, eps)
    out = jax.block_until_ready(out)
    assert out.shape == (N, F) and out.dtype == jnp.float32

    # Tight check (verifies kernel logic): same bf16-rounded inputs, f32 math.
    a_hat_t_f32 = (adj.T + (1.0 + eps) * jnp.eye(N, dtype=jnp.float32)
                   ).astype(jnp.bfloat16).astype(jnp.float32)
    x_bf_f32 = x.astype(jnp.bfloat16).astype(jnp.float32)
    ref_same_prec = a_hat_t_f32 @ x_bf_f32
    assert jnp.allclose(out, ref_same_prec, atol=1e-4, rtol=1e-4), \
        "mismatch vs same-precision reference"

    # Loose check vs exact f32 module semantics (only bf16 input rounding).
    ref_f32 = (1.0 + eps) * x + adj.T @ x
    assert jnp.allclose(out, ref_f32, atol=5e-2, rtol=5e-2), \
        "mismatch vs f32 module reference"

    print("KERNEL_OK")
</pallas_src>

<mosaic_0001>
module attributes {stable_mosaic.version = 11 : i64} {
  func.func @_gin_kernel(%arg0: i32, %arg1: i32, %arg2: memref<128x128xbf16, #tpu.memory_space<vmem>>, %arg3: memref<128x128xbf16, #tpu.memory_space<vmem>>, %arg4: memref<128x128xf32, #tpu.memory_space<vmem>>) attributes {dimension_semantics = [#tpu.dimension_semantics<parallel>, #tpu.dimension_semantics<arbitrary>], iteration_bounds = array<i64: 1, 1>, scalar_prefetch = 0 : i64, scratch_operands = 0 : i64, tpu.core_type = #tpu.core_type<tc>, window_params = [{transform_indices = @transform_0, window_bounds = array<i64: 128, 128>}, {transform_indices = @transform_1, window_bounds = array<i64: 128, 128>}, {transform_indices = @transform_2, window_bounds = array<i64: 128, 128>}]} {
    %c0 = arith.constant 0 : index
    %c0_0 = arith.constant 0 : index
    %0 = vector.load %arg2[%c0, %c0_0] : memref<128x128xbf16, #tpu.memory_space<vmem>>, vector<128x128xbf16>
    %c0_1 = arith.constant 0 : index
    %c0_2 = arith.constant 0 : index
    %1 = vector.load %arg3[%c0_1, %c0_2] : memref<128x128xbf16, #tpu.memory_space<vmem>>, vector<128x128xbf16>
    %cst = arith.constant dense<0.000000e+00> : vector<128x128xf32>
    %2 = tpu.matmul %0, %1, %cst {dimension_numbers = #tpu.dot_dimension_numbers<[1], [0], [0], [1], [0, 0, 1, 1], [], []>} : vector<128x128xbf16>, vector<128x128xbf16>, vector<128x128xf32> -> vector<128x128xf32>
    %c0_i32 = arith.constant 0 : i32
    %3 = arith.cmpi eq, %arg1, %c0_i32 : i32
    %4 = arith.extui %3 : i1 to i32
    %c0_i32_3 = arith.constant 0 : i32
    %5 = arith.cmpi ne, %4, %c0_i32_3 : i32
    scf.if %5 {
      %c0_6 = arith.constant 0 : index
      %c0_7 = arith.constant 0 : index
      %9 = vector.load %arg4[%c0_6, %c0_7] : memref<128x128xf32, #tpu.memory_space<vmem>>, vector<128x128xf32>
      tpu.vector_store %arg4[%c0_6, %c0_7], %2 {strides = array<i32>} : memref<128x128xf32, #tpu.memory_space<vmem>>, vector<128x128xf32>,
    } else {
    }
    %c0_i32_4 = arith.constant 0 : i32
    %6 = arith.cmpi sgt, %arg1, %c0_i32_4 : i32
    %7 = arith.extui %6 : i1 to i32
    %c0_i32_5 = arith.constant 0 : i32
    %8 = arith.cmpi ne, %7, %c0_i32_5 : i32
    scf.if %8 {
      %c0_6 = arith.constant 0 : index
      %c0_7 = arith.constant 0 : index
      %9 = vector.load %arg4[%c0_6, %c0_7] : memref<128x128xf32, #tpu.memory_space<vmem>>, vector<128x128xf32>
      %10 = arith.addf %9, %2 : vector<128x128xf32>
      %c0_8 = arith.constant 0 : index
      %c0_9 = arith.constant 0 : index
      %11 = vector.load %arg4[%c0_8, %c0_9] : memref<128x128xf32, #tpu.memory_space<vmem>>, vector<128x128xf32>
      tpu.vector_store %arg4[%c0_8, %c0_9], %10 {strides = array<i32>} : memref<128x128xf32, #tpu.memory_space<vmem>>, vector<128x128xf32>,
    } else {
    }
    return
  }
  func.func @transform_0(%arg0: i32, %arg1: i32) -> (i32, i32) {
    %c0_i32 = arith.constant 0 : i32
    return %arg0, %arg1 : i32, i32
  }
  func.func @transform_1(%arg0: i32, %arg1: i32) -> (i32, i32) {
    %c0_i32 = arith.constant 0 : i32
    %c0_i32_0 = arith.constant 0 : i32
    return %arg1, %c0_i32 : i32, i32
  }
  func.func @transform_2(%arg0: i32, %arg1: i32) -> (i32, i32) {
    %c0_i32 = arith.constant 0 : i32
    %c0_i32_0 = arith.constant 0 : i32
    return %arg0, %c0_i32 : i32, i32
  }
}

</mosaic_0001>

<llo_original>
// kernel: tpu_custom_call.1
$region0: #{tpu_custom_call.1}
  #allocation0 [shape = 'u32[]', space=smem, size = 0x4, offset = 0x4, fixed_abs, tag = 'smem constant byte address 0x4 - core index']
  #allocation1 [shape = 'u32[144,128]{1,0:T(1,128)}', space=vmem, size = 0x12000, scoped, tag = 'internal scratch']
  %s0 = inlined_call_operand.hbm [shape: bf16[128,128], index: 0, kind: input, shape index: {}]
  %s1 = inlined_call_operand.hbm [shape: bf16[128,128], index: 1, kind: input, shape index: {}]
  %s2 = inlined_call_operand.hbm [shape: f32[128,128], index: 2, kind: output, shape index: {}]
  %s3 = sld [smem:[#allocation0]]
  $region34: #{tpu_custom_call.1} parent=0
    _
  %s5 = ssub.s32 1, %s3
  %s6 = scalar_select 0, %s5, %s3
  $region1: #{tpu_custom_call.1} parent=0
    #allocation2 [shape = 'u8[32768]{0}', space=vmem, size = 0x8000, scoped, tag = 'input window, operand 0, single buffered']
    #allocation3 [shape = 's32[1]{0}', space=sflag, size = 0x4, scoped, tag = 'scoped memory for tpu_custom_call.1']
    #allocation4 [shape = 's32[1]{0}', space=sflag, size = 0x4, scoped, tag = 'scoped memory for tpu_custom_call.1']
    #allocation5 [shape = 'u8[32768]{0}', space=vmem, size = 0x8000, scoped, tag = 'input window, operand 1, single buffered']
    #allocation6 [shape = 's32[1]{0}', space=sflag, size = 0x4, scoped, tag = 'scoped memory for tpu_custom_call.1']
    #allocation7 [shape = 'u8[65536]{0}', space=vmem, size = 0x10000, scoped, tag = 'output window, operand 0, single buffered']
    %7 = vsyncpa [#allocation3], 0
    %8 = vsyncpa [#allocation6], 0
    %9 = vsyncpa [#allocation4], 0
    // Predicated region
    $region2: #{tpu_custom_call.1} parent=1 // pred_check
      _
    $region3: #{tpu_custom_call.1} parent=1 // pred_check_branch
      %11 = sbr.rel (0) target = $region5
    $region4: #{tpu_custom_call.1} parent=1 // pred_region
      %s13 = ssub.s32 1024, 1024
      %14 = vsyncadd [#allocation3], %s13
      %s15 = sshll.u32 [#allocation2], 4
      %s16 = int_to_ptr.vmem [resolvable:$true] %s15
      %21 = dma.hbm_to_vmem [thread:$0]  %s0, 1024, %s16, [#allocation3], 64, 64, 4
    $region5: #{tpu_custom_call.1} parent=1 // pred_fallthru
      _
    // Predicated region
    $region6: #{tpu_custom_call.1} parent=1 // pred_check
      _
    $region7: #{tpu_custom_call.1} parent=1 // pred_check_branch
      %23 = sbr.rel (0) target = $region9
    $region8: #{tpu_custom_call.1} parent=1 // pred_region
      %s25 = ssub.s32 1024, 1024
      %26 = vsyncadd [#allocation6], %s25
      %s27 = sshll.u32 [#allocation5], 4
      %s28 = int_to_ptr.vmem [resolvable:$true] %s27
      %33 = dma.hbm_to_vmem [thread:$0]  %s1, 1024, %s28, [#allocation6], 64, 64, 4
    $region9: #{tpu_custom_call.1} parent=1 // pred_fallthru
      _
    // Predicated region
    $region10: #{tpu_custom_call.1} parent=1 // pred_check
      _
    $region11: #{tpu_custom_call.1} parent=1 // pred_check_branch
      %35 = sbr.rel (0) target = $region13
    $region12: #{tpu_custom_call.1} parent=1 // pred_region
      %36 = dma.done [#allocation3], 1024
    $region13: #{tpu_custom_call.1} parent=1 // pred_fallthru
      _
    // Predicated region
    $region14: #{tpu_custom_call.1} parent=1 // pred_check
      _
    $region15: #{tpu_custom_call.1} parent=1 // pred_check_branch
      %38 = sbr.rel (0) target = $region17
    $region16: #{tpu_custom_call.1} parent=1 // pred_region
      %39 = dma.done [#allocation6], 1024
    $region17: #{tpu_custom_call.1} parent=1 // pred_fallthru
      _
    %v41 = vld [vmem:[#allocation2] sm:$0xf]
    %v42 = vld [vmem:[#allocation2 + $0x4] sm:$0xf]
    %v43 = vld [vmem:[#allocation2 + $0x8] sm:$0xf]
    %v44 = vld [vmem:[#allocation2 + $0xc] sm:$0xf]
    %v45 = vld [vmem:[#allocation2 + $0x10] sm:$0xf]
    %v46 = vld [vmem:[#allocation2 + $0x14] sm:$0xf]
    %v47 = vld [vmem:[#allocation2 + $0x18] sm:$0xf]
    %v48 = vld [vmem:[#allocation2 + $0x1c] sm:$0xf]
    %v49 = vld [vmem:[#allocation2 + $0x20] sm:$0xf]
    %v50 = vld [vmem:[#allocation2 + $0x24] sm:$0xf]
    %v51 = vld [vmem:[#allocation2 + $0x28] sm:$0xf]
    %v52 = vld [vmem:[#allocation2 + $0x2c] sm:$0xf]
    %v53 = vld [vmem:[#allocation2 + $0x30] sm:$0xf]
    %v54 = vld [vmem:[#allocation2 + $0x34] sm:$0xf]
    %v55 = vld [vmem:[#allocation2 + $0x38] sm:$0xf]
    %v56 = vld [vmem:[#allocation2 + $0x3c] sm:$0xf]
    %v57 = vld [vmem:[#allocation5] sm:$0xf]
    %v58 = vld [vmem:[#allocation5 + $0x4] sm:$0xf]
    %v59 = vld [vmem:[#allocation5 + $0x8] sm:$0xf]
    %v60 = vld [vmem:[#allocation5 + $0xc] sm:$0xf]
    %v61 = vld [vmem:[#allocation5 + $0x10] sm:$0xf]
    %v62 = vld [vmem:[#allocation5 + $0x14] sm:$0xf]
    %v63 = vld [vmem:[#allocation5 + $0x18] sm:$0xf]
    %v64 = vld [vmem:[#allocation5 + $0x1c] sm:$0xf]
    %v65 = vld [vmem:[#allocation5 + $0x20] sm:$0xf]
    %v66 = vld [vmem:[#allocation5 + $0x24] sm:$0xf]
    %v67 = vld [vmem:[#allocation5 + $0x28] sm:$0xf]
    %v68 = vld [vmem:[#allocation5 + $0x2c] sm:$0xf]
    %v69 = vld [vmem:[#allocation5 + $0x30] sm:$0xf]
    %v70 = vld [vmem:[#allocation5 + $0x34] sm:$0xf]
    %v71 = vld [vmem:[#allocation5 + $0x38] sm:$0xf]
    %v72 = vld [vmem:[#allocation5 + $0x3c] sm:$0xf]
    %v89 = vunpack.c.l.b16 %v41
    %v90 = vunpack.c.l.b16 %v42
    %v91 = vunpack.c.l.b16 %v43
    %v92 = vunpack.c.l.b16 %v44
    %v93 = vunpack.c.l.b16 %v45
    %v94 = vunpack.c.l.b16 %v46
    %v95 = vunpack.c.l.b16 %v47
    %v96 = vunpack.c.l.b16 %v48
    %v97 = vunpack.c.l.b16 %v49
    %v98 = vunpack.c.l.b16 %v50
    %v99 = vunpack.c.l.b16 %v51
    %v100 = vunpack.c.l.b16 %v52
    %v101 = vunpack.c.l.b16 %v53
    %v102 = vunpack.c.l.b16 %v54
    %v103 = vunpack.c.l.b16 %v55
    %v104 = vunpack.c.l.b16 %v56
    %v105 = vpack.c.b16 %v90, %v89
    %v106 = vpack.c.b16 %v92, %v91
    %v107 = vpack.c.b16 %v94, %v93
    %v108 = vpack.c.b16 %v96, %v95
    %v109 = vpack.c.b16 %v98, %v97
    %v110 = vpack.c.b16 %v100, %v99
    %v111 = vpack.c.b16 %v102, %v101
    %v112 = vpack.c.b16 %v104, %v103
    %v137 = vunpack.c.l.b16 %v57
    %v138 = vunpack.c.l.b16 %v58
    %v139 = vunpack.c.l.b16 %v59
    %v140 = vunpack.c.l.b16 %v60
    %v141 = vunpack.c.l.b16 %v61
    %v142 = vunpack.c.l.b16 %v62
    %v143 = vunpack.c.l.b16 %v63
    %v144 = vunpack.c.l.b16 %v64
    %v145 = vunpack.c.l.b16 %v65
    %v146 = vunpack.c.l.b16 %v66
    %v147 = vunpack.c.l.b16 %v67
    %v148 = vunpack.c.l.b16 %v68
    %v149 = vunpack.c.l.b16 %v69
    %v150 = vunpack.c.l.b16 %v70
    %v151 = vunpack.c.l.b16 %v71
    %v152 = vunpack.c.l.b16 %v72
    %v153 = vpack.c.b16 %v138, %v137
    %v154 = vpack.c.b16 %v140, %v139
    %v155 = vpack.c.b16 %v142, %v141
    %v156 = vpack.c.b16 %v144, %v143
    %v157 = vpack.c.b16 %v146, %v145
    %v158 = vpack.c.b16 %v148, %v147
    %v159 = vpack.c.b16 %v150, %v149
    %v160 = vpack.c.b16 %v152, %v151
    %169 = vmatprep.subr.bf16.mxu0 0
    %170 = vmatpush1.bf16.msra.mxu0 %v153
    %171 = vmatprep.subr.bf16.mxu0 0
    %172 = vmatpush1.bf16.msra.mxu0 %v154
    %173 = vmatprep.subr.bf16.mxu0 0
    %174 = vmatpush1.bf16.msra.mxu0 %v155
    %175 = vmatprep.subr.bf16.mxu0 0
    %176 = vmatpush1.bf16.msra.mxu0 %v156
    %177 = vmatprep.subr.bf16.mxu0 0
    %178 = vmatpush1.bf16.msra.mxu0 %v157
    %179 = vmatprep.subr.bf16.mxu0 0
    %180 = vmatpush1.bf16.msra.mxu0 %v158
    %181 = vmatprep.subr.bf16.mxu0 0
    %182 = vmatpush1.bf16.msra.mxu0 %v159
    %183 = vmatprep.subr.bf16.mxu0 0
    %184 = vmatpush1.bf16.msra.mxu0 %v160
    %185 = vmatprep.subr.bf16.mxu0 0
    %186 = vmatpush1.bf16.msra.mxu0 0
    %187 = vmatprep.subr.bf16.mxu0 0
    %188 = vmatpush1.bf16.msra.mxu0 0
    %189 = vmatprep.subr.bf16.mxu0 0
    %190 = vmatpush1.bf16.msra.mxu0 0
    %191 = vmatprep.subr.bf16.mxu0 0
    %192 = vmatpush1.bf16.msra.mxu0 0
    %193 = vmatprep.subr.bf16.mxu0 0
    %194 = vmatpush1.bf16.msra.mxu0 0
    %195 = vmatprep.subr.bf16.mxu0 0
    %196 = vmatpush1.bf16.msra.mxu0 0
    %197 = vmatprep.subr.bf16.mxu0 0
    %198 = vmatpush1.bf16.msra.mxu0 0
    %199 = vmatprep.subr.bf16.mxu0 0
    %200 = vmatpush1.bf16.msra.mxu0 0
    %201 = vmatprep.mubr.bf16.mxu0 0
    %202 = vmatmul.mubr.bf16.gmra.mrb[0].mxu0 %v105
    %v203 = vpop.f32.mrb[0].mxu0
    %v204 = vadd.f32 0.0, %v203
    %v205 = vpop.f32.mrb[0].mxu0
    %v206 = vpop.f32.mrb[0].mxu0
    %v207 = vadd.f32 0.0, %v206
    %v208 = vpop.f32.mrb[0].mxu0
    %209 = vmatprep.mubr.bf16.mxu0 0
    %210 = vmatmul.mubr.bf16.gmra.mrb[0].mxu0 %v106
    %v211 = vpop.f32.mrb[0].mxu0
    %v212 = vadd.f32 0.0, %v211
    %v213 = vpop.f32.mrb[0].mxu0
    %v214 = vpop.f32.mrb[0].mxu0
    %v215 = vadd.f32 0.0, %v214
    %v216 = vpop.f32.mrb[0].mxu0
    %217 = vmatprep.mubr.bf16.mxu0 0
    %218 = vmatmul.mubr.bf16.gmra.mrb[0].mxu0 %v107
    %v219 = vpop.f32.mrb[0].mxu0
    %v220 = vadd.f32 0.0, %v219
    %v221 = vpop.f32.mrb[0].mxu0
    %v222 = vpop.f32.mrb[0].mxu0
    %v223 = vadd.f32 0.0, %v222
    %v224 = vpop.f32.mrb[0].mxu0
    %225 = vmatprep.mubr.bf16.mxu0 0
    %226 = vmatmul.mubr.bf16.gmra.mrb[0].mxu0 %v108
    %v227 = vpop.f32.mrb[0].mxu0
    %v228 = vadd.f32 0.0, %v227
    %v229 = vpop.f32.mrb[0].mxu0
    %v230 = vpop.f32.mrb[0].mxu0
    %v231 = vadd.f32 0.0, %v230
    %v232 = vpop.f32.mrb[0].mxu0
    %233 = vmatprep.mubr.bf16.mxu0 0
    %234 = vmatmul.mubr.bf16.gmra.mrb[0].mxu0 %v109
    %v235 = vpop.f32.mrb[0].mxu0
    %v236 = vadd.f32 0.0, %v235
    %v237 = vpop.f32.mrb[0].mxu0
    %v238 = vpop.f32.mrb[0].mxu0
    %v239 = vadd.f32 0.0, %v238
    %v240 = vpop.f32.mrb[0].mxu0
    %241 = vmatprep.mubr.bf16.mxu0 0
    %242 = vmatmul.mubr.bf16.gmra.mrb[0].mxu0 %v110
    %v243 = vpop.f32.mrb[0].mxu0
    %v244 = vadd.f32 0.0, %v243
    %v245 = vpop.f32.mrb[0].mxu0
    %v246 = vpop.f32.mrb[0].mxu0
    %v247 = vadd.f32 0.0, %v246
    %v248 = vpop.f32.mrb[0].mxu0
    %249 = vmatprep.mubr.bf16.mxu0 0
    %250 = vmatmul.mubr.bf16.gmra.mrb[0].mxu0 %v111
    %v251 = vpop.f32.mrb[0].mxu0
    %v252 = vadd.f32 0.0, %v251
    %v253 = vpop.f32.mrb[0].mxu0
    %v254 = vpop.f32.mrb[0].mxu0
    %v255 = vadd.f32 0.0, %v254
    %v256 = vpop.f32.mrb[0].mxu0
    %257 = vmatprep.mubr.bf16.mxu0 0
    %258 = vmatmul.mubr.bf16.gmra.mrb[0].mxu0 %v112
    %v259 = vpop.f32.mrb[0].mxu0
    %v260 = vadd.f32 0.0, %v259
    %v261 = vpop.f32.mrb[0].mxu0
    %v262 = vpop.f32.mrb[0].mxu0
    %v263 = vadd.f32 0.0, %v262
    %v264 = vpop.f32.mrb[0].mxu0
    %265 = vdwg.mxu0
    %p266 = scmp.eq.s32.totalorder 0, 0
    // Predicated region
    $region18: #{tpu_custom_call.1} parent=1 // pred_check
      %p267 = pneg %p266
    $region19: #{tpu_custom_call.1} parent=1 // pred_check_branch
      %269 = sbr.rel (%p267) target = $region21
    $region20: #{tpu_custom_call.1} parent=1 // pred_region
      %270 = vst [vmem:[#allocation7] sm:$0xff] %v204
      %271 = vst [vmem:[#allocation7 + $0x8] sm:$0xff] %v207
      %272 = vst [vmem:[#allocation7 + $0x10] sm:$0xff] %v212
      %273 = vst [vmem:[#allocation7 + $0x18] sm:$0xff] %v215
      %274 = vst [vmem:[#allocation7 + $0x20] sm:$0xff] %v220
      %275 = vst [vmem:[#allocation7 + $0x28] sm:$0xff] %v223
      %276 = vst [vmem:[#allocation7 + $0x30] sm:$0xff] %v228
      %277 = vst [vmem:[#allocation7 + $0x38] sm:$0xff] %v231
      %278 = vst [vmem:[#allocation7 + $0x40] sm:$0xff] %v236
      %279 = vst [vmem:[#allocation7 + $0x48] sm:$0xff] %v239
      %280 = vst [vmem:[#allocation7 + $0x50] sm:$0xff] %v244
      %281 = vst [vmem:[#allocation7 + $0x58] sm:$0xff] %v247
      %282 = vst [vmem:[#allocation7 + $0x60] sm:$0xff] %v252
      %283 = vst [vmem:[#allocation7 + $0x68] sm:$0xff] %v255
      %284 = vst [vmem:[#allocation7 + $0x70] sm:$0xff] %v260
      %285 = vst [vmem:[#allocation7 + $0x78] sm:$0xff] %v263
    $region21: #{tpu_custom_call.1} parent=1 // pred_fallthru
      _
    %p286 = scmp.gt.s32.totalorder 0, 0
    // Predicated region
    $region22: #{tpu_custom_call.1} parent=1 // pred_check
      %p287 = pneg %p286
    $region23: #{tpu_custom_call.1} parent=1 // pred_check_branch
      %289 = sbr.rel (%p287) target = $region25
    $region24: #{tpu_custom_call.1} parent=1 // pred_region
      %v290 = vld [vmem:[#allocation7] sm:$0xff]
      %v291 = vld [vmem:[#allocation7 + $0x8] sm:$0xff]
      %v292 = vld [vmem:[#allocation7 + $0x10] sm:$0xff]
      %v293 = vld [vmem:[#allocation7 + $0x18] sm:$0xff]
      %v294 = vld [vmem:[#allocation7 + $0x20] sm:$0xff]
      %v295 = vld [vmem:[#allocation7 + $0x28] sm:$0xff]
      %v296 = vld [vmem:[#allocation7 + $0x30] sm:$0xff]
      %v297 = vld [vmem:[#allocation7 + $0x38] sm:$0xff]
      %v298 = vld [vmem:[#allocation7 + $0x40] sm:$0xff]
      %v299 = vld [vmem:[#allocation7 + $0x48] sm:$0xff]
      %v300 = vld [vmem:[#allocation7 + $0x50] sm:$0xff]
      %v301 = vld [vmem:[#allocation7 + $0x58] sm:$0xff]
      %v302 = vld [vmem:[#allocation7 + $0x60] sm:$0xff]
      %v303 = vld [vmem:[#allocation7 + $0x68] sm:$0xff]
      %v304 = vld [vmem:[#allocation7 + $0x70] sm:$0xff]
      %v305 = vld [vmem:[#allocation7 + $0x78] sm:$0xff]
      %v306 = vadd.f32 %v290, %v204
      %v307 = vadd.f32 %v291, %v207
      %v308 = vadd.f32 %v292, %v212
      %v309 = vadd.f32 %v293, %v215
      %v310 = vadd.f32 %v294, %v220
      %v311 = vadd.f32 %v295, %v223
      %v312 = vadd.f32 %v296, %v228
      %v313 = vadd.f32 %v297, %v231
      %v314 = vadd.f32 %v298, %v236
      %v315 = vadd.f32 %v299, %v239
      %v316 = vadd.f32 %v300, %v244
      %v317 = vadd.f32 %v301, %v247
      %v318 = vadd.f32 %v302, %v252
      %v319 = vadd.f32 %v303, %v255
      %v320 = vadd.f32 %v304, %v260
      %v321 = vadd.f32 %v305, %v263
      %322 = vst [vmem:[#allocation7] sm:$0xff] %v306
      %323 = vst [vmem:[#allocation7 + $0x8] sm:$0xff] %v307
      %324 = vst [vmem:[#allocation7 + $0x10] sm:$0xff] %v308
      %325 = vst [vmem:[#allocation7 + $0x18] sm:$0xff] %v309
      %326 = vst [vmem:[#allocation7 + $0x20] sm:$0xff] %v310
      %327 = vst [vmem:[#allocation7 + $0x28] sm:$0xff] %v311
      %328 = vst [vmem:[#allocation7 + $0x30] sm:$0xff] %v312
      %329 = vst [vmem:[#allocation7 + $0x38] sm:$0xff] %v313
      %330 = vst [vmem:[#allocation7 + $0x40] sm:$0xff] %v314
      %331 = vst [vmem:[#allocation7 + $0x48] sm:$0xff] %v315
      %332 = vst [vmem:[#allocation7 + $0x50] sm:$0xff] %v316
      %333 = vst [vmem:[#allocation7 + $0x58] sm:$0xff] %v317
      %334 = vst [vmem:[#allocation7 + $0x60] sm:$0xff] %v318
      %335 = vst [vmem:[#allocation7 + $0x68] sm:$0xff] %v319
      %336 = vst [vmem:[#allocation7 + $0x70] sm:$0xff] %v320
      %337 = vst [vmem:[#allocation7 + $0x78] sm:$0xff] %v321
    $region25: #{tpu_custom_call.1} parent=1 // pred_fallthru
      _
    // Predicated region
    $region26: #{tpu_custom_call.1} parent=1 // pred_check
      _
    $region27: #{tpu_custom_call.1} parent=1 // pred_check_branch
      %339 = sbr.rel (0) target = $region29
    $region28: #{tpu_custom_call.1} parent=1 // pred_region
      %s341 = ssub.s32 2048, 2048
      %342 = vsyncadd [#allocation4], %s341
      %s343 = sshll.u32 [#allocation7], 4
      %s344 = int_to_ptr.vmem [resolvable:$true] %s343
      %349 = dma.vmem_to_hbm [thread:$0]  %s344, 2048, %s2, [#allocation4], 128, 128, 8
    $region29: #{tpu_custom_call.1} parent=1 // pred_fallthru
      _
    // Predicated region
    $region30: #{tpu_custom_call.1} parent=1 // pred_check
      _
    $region31: #{tpu_custom_call.1} parent=1 // pred_check_branch
      %351 = sbr.rel (0) target = $region33
    $region32: #{tpu_custom_call.1} parent=1 // pred_region
      %352 = dma.done [#allocation4], 2048
    $region33: #{tpu_custom_call.1} parent=1 // pred_fallthru
      _
    %353 = vsyncpa [#allocation3], 1
    %354 = vsyncpa [#allocation6], 1
    %355 = vsyncpa [#allocation4], 1

</llo_original>
